<compile_context>
chip_gen: v5e
topology: v5e:2x2
jax: 0.10.0
libtpu: 0.0.40
codegen_flags: <defaults>
</compile_context>

<pallas_src>
import functools

import jax
import jax.numpy as jnp
from jax.experimental import pallas as pl
from jax.experimental.pallas import tpu as pltpu

LN_EPS = 1e-5       # PyTorch nn.LayerNorm default
LANE = 128          # TPU lane width (last-dim tiling)
SUBLANE = 8         # sublane tiling (second-to-last dim)


def _round_up(x, m):
    return (x + m - 1) // m * m


def _make_fused_kernel(n_layers, d_in, d_out, din_p, dout_p):
    """Builds a kernel fusing n_layers x (LayerNorm -> ReLU -> Linear).

    Kernel args: (x_ref, [gamma, beta, W, b] * n_layers, o_ref).
    All feature dims are padded to din_p / dout_p (multiples of 128); the
    padded entries of x / gamma / beta / W / b are zero, which keeps the
    padded activation columns exactly zero through every layer.
    """

    def kernel(x_ref, *refs):
        o_ref = refs[-1]
        param_refs = refs[:-1]          # 4 refs per layer

        # Lane-validity masks for the zero-padded feature dims (hoisted out of
        # the per-layer loop).
        in_mask = jax.lax.broadcasted_iota(jnp.int32, (1, din_p), 1) < d_in
        out_mask = jax.lax.broadcasted_iota(jnp.int32, (1, dout_p), 1) < d_out

        y = x_ref[...].astype(jnp.float32)          # (tm, din_p); pad cols are 0
        mask, d_valid = in_mask, d_in
        for layer in range(n_layers):
            g_ref, beta_ref, w_ref, b_ref = param_refs[4 * layer:4 * layer + 4]

            # --- LayerNorm over the valid features only (f32) ---
            inv_d = 1.0 / float(d_valid)
            mean = jnp.sum(y, axis=-1, keepdims=True) * inv_d   # pad cols are 0
            centered = jnp.where(mask, y - mean, 0.0)
            var = jnp.sum(centered * centered, axis=-1, keepdims=True) * inv_d
            yn = centered * jax.lax.rsqrt(var + LN_EPS)
            yn = (yn * g_ref[...].astype(jnp.float32)
                  + beta_ref[...].astype(jnp.float32))          # pad cols -> 0

            # --- ReLU ---
            yn = jnp.maximum(yn, 0.0)

            # --- Linear: bf16 MXU operands, f32 accumulation ---
            y = jnp.dot(yn.astype(jnp.bfloat16), w_ref[...],
                        preferred_element_type=jnp.float32)     # (tm, dout_p)
            y = y + b_ref[...].astype(jnp.float32)              # pad cols stay 0

            mask, d_valid = out_mask, d_out

        o_ref[...] = y.astype(o_ref.dtype)

    return kernel


@jax.jit
def projection_head_forward(x, params):
    """x: (B, input_size); params: list of {gamma, beta, w:(in,out), b}."""
    batch, d_in = x.shape
    n_layers = len(params)
    d_out = params[0]["w"].shape[1]

    din_p = _round_up(d_in, LANE)
    dout_p = _round_up(d_out, LANE)
    batch_p = _round_up(batch, SUBLANE)
    block_m = min(256, batch_p)                      # 128-512 row tiles for big B
    grid = (pl.cdiv(batch_p, block_m),)

    # Zero-pad activations & params to lane-dense shapes; weights -> bf16.
    x_p = jnp.pad(x.astype(jnp.float32),
                  ((0, batch_p - batch), (0, din_p - d_in)))

    flat_inputs = [x_p]
    in_specs = [pl.BlockSpec((block_m, din_p), lambda i: (i, 0))]
    dp_in, dv_in = din_p, d_in
    for p in params:
        g = jnp.pad(p["gamma"].astype(jnp.float32),
                    (0, dp_in - dv_in)).reshape(1, dp_in)
        be = jnp.pad(p["beta"].astype(jnp.float32),
                     (0, dp_in - dv_in)).reshape(1, dp_in)
        w = jnp.pad(p["w"].astype(jnp.float32),
                    ((0, dp_in - dv_in), (0, dout_p - d_out))
                    ).astype(jnp.bfloat16)
        b = jnp.pad(p["b"].astype(jnp.float32),
                    (0, dout_p - d_out)).reshape(1, dout_p)
        flat_inputs += [g, be, w, b]
        in_specs += [
            pl.BlockSpec((1, dp_in), lambda i: (0, 0)),          # gamma
            pl.BlockSpec((1, dp_in), lambda i: (0, 0)),          # beta
            pl.BlockSpec((dp_in, dout_p), lambda i: (0, 0)),     # W (in, out), bf16
            pl.BlockSpec((1, dout_p), lambda i: (0, 0)),         # bias
        ]
        dp_in, dv_in = dout_p, d_out

    kernel = _make_fused_kernel(n_layers, d_in, d_out, din_p, dout_p)

    out_padded = pl.pallas_call(
        kernel,
        out_shape=jax.ShapeDtypeStruct((batch_p, dout_p), x.dtype),
        grid_spec=pltpu.PrefetchScalarGridSpec(
            num_scalar_prefetch=0,
            grid=grid,
            in_specs=in_specs,
            out_specs=pl.BlockSpec((block_m, dout_p), lambda i: (i, 0)),
        ),
        compiler_params=pltpu.CompilerParams(
            dimension_semantics=("parallel",)),
    )(*flat_inputs)

    return out_padded[:batch, :d_out]


def init_projection_head_params(key, input_size, output_size, n_layers):
    """Deterministic synthetic params mirroring ProjectionHead.__init__ shapes."""
    params = []
    d_in = input_size
    for _ in range(n_layers):
        d_out = output_size
        key, kw, kb = jax.random.split(key, 3)
        bound = 1.0 / jnp.sqrt(jnp.float32(d_in))
        w = jax.random.uniform(kw, (d_in, d_out), jnp.float32, -bound, bound)
        b = jax.random.uniform(kb, (d_out,), jnp.float32, -bound, bound)
        gamma = jnp.ones((d_in,), jnp.float32)   # LayerNorm weight
        beta = jnp.zeros((d_in,), jnp.float32)   # LayerNorm bias
        params.append({"gamma": gamma, "beta": beta, "w": w, "b": b})
        d_in = d_out
    return params


def projection_head_reference(x, params):
    """Pure-JAX (f32) reference matching PyTorch semantics."""
    y = x
    for p in params:
        mean = jnp.mean(y, axis=-1, keepdims=True)
        var = jnp.mean((y - mean) ** 2, axis=-1, keepdims=True)
        yn = (y - mean) / jnp.sqrt(var + LN_EPS)
        yn = yn * p["gamma"] + p["beta"]
        yn = jnp.maximum(yn, 0.0)
        y = yn @ p["w"] + p["b"]
    return y


if __name__ == "__main__":
    key = jax.random.PRNGKey(0)
    batch = 8
    input_size = 32
    output_size = 64
    n_layers = 2

    key, kx, kp = jax.random.split(key, 3)
    x = jax.random.normal(kx, (batch, input_size), jnp.float32)
    params = init_projection_head_params(kp, input_size, output_size, n_layers)

    out = projection_head_forward(x, params)
    out = jax.block_until_ready(out)

    ref = projection_head_reference(x, params)
    assert out.shape == (batch, output_size), out.shape
    # bf16 MXU operands (f32 accumulation) -> slightly looser tolerance than f32.
    assert jnp.allclose(out, ref, atol=5e-2, rtol=5e-2), (
        float(jnp.max(jnp.abs(out - ref))))

    print("KERNEL_OK")
</pallas_src>

<mosaic_0001>
module attributes {stable_mosaic.version = 11 : i64} {
  func.func @kernel(%arg0: i32, %arg1: memref<8x128xf32, #tpu.memory_space<vmem>>, %arg2: memref<1x128xf32, #tpu.memory_space<vmem>>, %arg3: memref<1x128xf32, #tpu.memory_space<vmem>>, %arg4: memref<128x128xbf16, #tpu.memory_space<vmem>>, %arg5: memref<1x128xf32, #tpu.memory_space<vmem>>, %arg6: memref<1x128xf32, #tpu.memory_space<vmem>>, %arg7: memref<1x128xf32, #tpu.memory_space<vmem>>, %arg8: memref<128x128xbf16, #tpu.memory_space<vmem>>, %arg9: memref<1x128xf32, #tpu.memory_space<vmem>>, %arg10: memref<8x128xf32, #tpu.memory_space<vmem>>) attributes {dimension_semantics = [#tpu.dimension_semantics<parallel>], iteration_bounds = array<i64: 1>, scalar_prefetch = 0 : i64, scratch_operands = 0 : i64, tpu.core_type = #tpu.core_type<tc>, window_params = [{transform_indices = @transform_0, window_bounds = array<i64: 8, 128>}, {pipeline_mode = #tpu.pipeline_mode<synchronous>, transform_indices = @transform_1, window_bounds = array<i64: 1, 128>}, {pipeline_mode = #tpu.pipeline_mode<synchronous>, transform_indices = @transform_2, window_bounds = array<i64: 1, 128>}, {pipeline_mode = #tpu.pipeline_mode<synchronous>, transform_indices = @transform_3, window_bounds = array<i64: 128, 128>}, {pipeline_mode = #tpu.pipeline_mode<synchronous>, transform_indices = @transform_4, window_bounds = array<i64: 1, 128>}, {pipeline_mode = #tpu.pipeline_mode<synchronous>, transform_indices = @transform_5, window_bounds = array<i64: 1, 128>}, {pipeline_mode = #tpu.pipeline_mode<synchronous>, transform_indices = @transform_6, window_bounds = array<i64: 1, 128>}, {pipeline_mode = #tpu.pipeline_mode<synchronous>, transform_indices = @transform_7, window_bounds = array<i64: 128, 128>}, {pipeline_mode = #tpu.pipeline_mode<synchronous>, transform_indices = @transform_8, window_bounds = array<i64: 1, 128>}, {transform_indices = @transform_9, window_bounds = array<i64: 8, 128>}]} {
    %0 = tpu.iota {dimensions = array<i32: 1>} : vector<1x128xi32>
    %c32_i32 = arith.constant 32 : i32
    %1 = vector.broadcast %c32_i32 : i32 to vector<1x128xi32>
    %2 = arith.cmpi slt, %0, %1 : vector<1x128xi32>
    %3 = tpu.iota {dimensions = array<i32: 1>} : vector<1x128xi32>
    %c64_i32 = arith.constant 64 : i32
    %4 = vector.broadcast %c64_i32 : i32 to vector<1x128xi32>
    %5 = arith.cmpi slt, %3, %4 : vector<1x128xi32>
    %c0 = arith.constant 0 : index
    %c0_0 = arith.constant 0 : index
    %6 = vector.load %arg1[%c0, %c0_0] : memref<8x128xf32, #tpu.memory_space<vmem>>, vector<8x128xf32>
    %cst = arith.constant dense<0.000000e+00> : vector<8xf32>
    %7 = vector.multi_reduction <add>, %6, %cst [1] : vector<8x128xf32> to vector<8xf32>
    %8 = vector.shape_cast %7 : vector<8xf32> to vector<8x1xf32>
    %cst_1 = arith.constant 3.125000e-02 : f32
    %9 = vector.broadcast %cst_1 : f32 to vector<8x1xf32>
    %10 = arith.mulf %8, %9 : vector<8x1xf32>
    %11 = vector.broadcast %10 : vector<8x1xf32> to vector<8x128xf32>
    %12 = arith.subf %6, %11 : vector<8x128xf32>
    %cst_2 = arith.constant 0.000000e+00 : f32
    %13 = vector.shape_cast %2 : vector<1x128xi1> to vector<1x128xi1>
    %14 = vector.broadcast %13 : vector<1x128xi1> to vector<8x128xi1>
    %15 = vector.broadcast %cst_2 : f32 to vector<8x128xf32>
    %16 = arith.select %14, %12, %15 : vector<8x128xi1>, vector<8x128xf32>
    %17 = arith.mulf %16, %16 : vector<8x128xf32>
    %cst_3 = arith.constant dense<0.000000e+00> : vector<8xf32>
    %18 = vector.multi_reduction <add>, %17, %cst_3 [1] : vector<8x128xf32> to vector<8xf32>
    %19 = vector.shape_cast %18 : vector<8xf32> to vector<8x1xf32>
    %cst_4 = arith.constant 3.125000e-02 : f32
    %20 = vector.broadcast %cst_4 : f32 to vector<8x1xf32>
    %21 = arith.mulf %19, %20 : vector<8x1xf32>
    %cst_5 = arith.constant 9.99999974E-6 : f32
    %22 = vector.broadcast %cst_5 : f32 to vector<8x1xf32>
    %23 = arith.addf %21, %22 : vector<8x1xf32>
    %24 = math.rsqrt %23 : vector<8x1xf32>
    %25 = vector.broadcast %24 : vector<8x1xf32> to vector<8x128xf32>
    %26 = arith.mulf %16, %25 : vector<8x128xf32>
    %c0_6 = arith.constant 0 : index
    %c0_7 = arith.constant 0 : index
    %27 = vector.load %arg2[%c0_6, %c0_7] : memref<1x128xf32, #tpu.memory_space<vmem>>, vector<1x128xf32>
    %28 = vector.broadcast %27 : vector<1x128xf32> to vector<8x128xf32>
    %29 = arith.mulf %26, %28 : vector<8x128xf32>
    %c0_8 = arith.constant 0 : index
    %c0_9 = arith.constant 0 : index
    %30 = vector.load %arg3[%c0_8, %c0_9] : memref<1x128xf32, #tpu.memory_space<vmem>>, vector<1x128xf32>
    %31 = vector.broadcast %30 : vector<1x128xf32> to vector<8x128xf32>
    %32 = arith.addf %29, %31 : vector<8x128xf32>
    %cst_10 = arith.constant 0.000000e+00 : f32
    %33 = vector.broadcast %cst_10 : f32 to vector<8x128xf32>
    %34 = arith.maximumf %32, %33 : vector<8x128xf32>
    %35 = arith.truncf %34 : vector<8x128xf32> to vector<8x128xbf16>
    %c0_11 = arith.constant 0 : index
    %c0_12 = arith.constant 0 : index
    %36 = vector.load %arg4[%c0_11, %c0_12] : memref<128x128xbf16, #tpu.memory_space<vmem>>, vector<128x128xbf16>
    %cst_13 = arith.constant dense<0.000000e+00> : vector<8x128xf32>
    %37 = tpu.matmul %35, %36, %cst_13 {dimension_numbers = #tpu.dot_dimension_numbers<[1], [0], [0], [1], [0, 0, 1, 1], [], []>} : vector<8x128xbf16>, vector<128x128xbf16>, vector<8x128xf32> -> vector<8x128xf32>
    %c0_14 = arith.constant 0 : index
    %c0_15 = arith.constant 0 : index
    %38 = vector.load %arg5[%c0_14, %c0_15] : memref<1x128xf32, #tpu.memory_space<vmem>>, vector<1x128xf32>
    %39 = vector.broadcast %38 : vector<1x128xf32> to vector<8x128xf32>
    %40 = arith.addf %37, %39 : vector<8x128xf32>
    %cst_16 = arith.constant dense<0.000000e+00> : vector<8xf32>
    %41 = vector.multi_reduction <add>, %40, %cst_16 [1] : vector<8x128xf32> to vector<8xf32>
    %42 = vector.shape_cast %41 : vector<8xf32> to vector<8x1xf32>
    %cst_17 = arith.constant 1.562500e-02 : f32
    %43 = vector.broadcast %cst_17 : f32 to vector<8x1xf32>
    %44 = arith.mulf %42, %43 : vector<8x1xf32>
    %45 = vector.broadcast %44 : vector<8x1xf32> to vector<8x128xf32>
    %46 = arith.subf %40, %45 : vector<8x128xf32>
    %cst_18 = arith.constant 0.000000e+00 : f32
    %47 = vector.shape_cast %5 : vector<1x128xi1> to vector<1x128xi1>
    %48 = vector.broadcast %47 : vector<1x128xi1> to vector<8x128xi1>
    %49 = vector.broadcast %cst_18 : f32 to vector<8x128xf32>
    %50 = arith.select %48, %46, %49 : vector<8x128xi1>, vector<8x128xf32>
    %51 = arith.mulf %50, %50 : vector<8x128xf32>
    %cst_19 = arith.constant dense<0.000000e+00> : vector<8xf32>
    %52 = vector.multi_reduction <add>, %51, %cst_19 [1] : vector<8x128xf32> to vector<8xf32>
    %53 = vector.shape_cast %52 : vector<8xf32> to vector<8x1xf32>
    %cst_20 = arith.constant 1.562500e-02 : f32
    %54 = vector.broadcast %cst_20 : f32 to vector<8x1xf32>
    %55 = arith.mulf %53, %54 : vector<8x1xf32>
    %cst_21 = arith.constant 9.99999974E-6 : f32
    %56 = vector.broadcast %cst_21 : f32 to vector<8x1xf32>
    %57 = arith.addf %55, %56 : vector<8x1xf32>
    %58 = math.rsqrt %57 : vector<8x1xf32>
    %59 = vector.broadcast %58 : vector<8x1xf32> to vector<8x128xf32>
    %60 = arith.mulf %50, %59 : vector<8x128xf32>
    %c0_22 = arith.constant 0 : index
    %c0_23 = arith.constant 0 : index
    %61 = vector.load %arg6[%c0_22, %c0_23] : memref<1x128xf32, #tpu.memory_space<vmem>>, vector<1x128xf32>
    %62 = vector.broadcast %61 : vector<1x128xf32> to vector<8x128xf32>
    %63 = arith.mulf %60, %62 : vector<8x128xf32>
    %c0_24 = arith.constant 0 : index
    %c0_25 = arith.constant 0 : index
    %64 = vector.load %arg7[%c0_24, %c0_25] : memref<1x128xf32, #tpu.memory_space<vmem>>, vector<1x128xf32>
    %65 = vector.broadcast %64 : vector<1x128xf32> to vector<8x128xf32>
    %66 = arith.addf %63, %65 : vector<8x128xf32>
    %cst_26 = arith.constant 0.000000e+00 : f32
    %67 = vector.broadcast %cst_26 : f32 to vector<8x128xf32>
    %68 = arith.maximumf %66, %67 : vector<8x128xf32>
    %69 = arith.truncf %68 : vector<8x128xf32> to vector<8x128xbf16>
    %c0_27 = arith.constant 0 : index
    %c0_28 = arith.constant 0 : index
    %70 = vector.load %arg8[%c0_27, %c0_28] : memref<128x128xbf16, #tpu.memory_space<vmem>>, vector<128x128xbf16>
    %cst_29 = arith.constant dense<0.000000e+00> : vector<8x128xf32>
    %71 = tpu.matmul %69, %70, %cst_29 {dimension_numbers = #tpu.dot_dimension_numbers<[1], [0], [0], [1], [0, 0, 1, 1], [], []>} : vector<8x128xbf16>, vector<128x128xbf16>, vector<8x128xf32> -> vector<8x128xf32>
    %c0_30 = arith.constant 0 : index
    %c0_31 = arith.constant 0 : index
    %72 = vector.load %arg9[%c0_30, %c0_31] : memref<1x128xf32, #tpu.memory_space<vmem>>, vector<1x128xf32>
    %73 = vector.broadcast %72 : vector<1x128xf32> to vector<8x128xf32>
    %74 = arith.addf %71, %73 : vector<8x128xf32>
    %c0_32 = arith.constant 0 : index
    %c0_33 = arith.constant 0 : index
    %75 = vector.load %arg10[%c0_32, %c0_33] : memref<8x128xf32, #tpu.memory_space<vmem>>, vector<8x128xf32>
    tpu.vector_store %arg10[%c0_32, %c0_33], %74 {strides = array<i32>} : memref<8x128xf32, #tpu.memory_space<vmem>>, vector<8x128xf32>,
    return
  }
  func.func @transform_0(%arg0: i32) -> (i32, i32) {
    %c0_i32 = arith.constant 0 : i32
    %c0_i32_0 = arith.constant 0 : i32
    return %arg0, %c0_i32 : i32, i32
  }
  func.func @transform_1(%arg0: i32) -> (i32, i32) {
    %c0_i32 = arith.constant 0 : i32
    %c0_i32_0 = arith.constant 0 : i32
    %c0_i32_1 = arith.constant 0 : i32
    return %c0_i32, %c0_i32_0 : i32, i32
  }
  func.func @transform_2(%arg0: i32) -> (i32, i32) {
    %c0_i32 = arith.constant 0 : i32
    %c0_i32_0 = arith.constant 0 : i32
    %c0_i32_1 = arith.constant 0 : i32
    return %c0_i32, %c0_i32_0 : i32, i32
  }
  func.func @transform_3(%arg0: i32) -> (i32, i32) {
    %c0_i32 = arith.constant 0 : i32
    %c0_i32_0 = arith.constant 0 : i32
    %c0_i32_1 = arith.constant 0 : i32
    return %c0_i32, %c0_i32_0 : i32, i32
  }
  func.func @transform_4(%arg0: i32) -> (i32, i32) {
    %c0_i32 = arith.constant 0 : i32
    %c0_i32_0 = arith.constant 0 : i32
    %c0_i32_1 = arith.constant 0 : i32
    return %c0_i32, %c0_i32_0 : i32, i32
  }
  func.func @transform_5(%arg0: i32) -> (i32, i32) {
    %c0_i32 = arith.constant 0 : i32
    %c0_i32_0 = arith.constant 0 : i32
    %c0_i32_1 = arith.constant 0 : i32
    return %c0_i32, %c0_i32_0 : i32, i32
  }
  func.func @transform_6(%arg0: i32) -> (i32, i32) {
    %c0_i32 = arith.constant 0 : i32
    %c0_i32_0 = arith.constant 0 : i32
    %c0_i32_1 = arith.constant 0 : i32
    return %c0_i32, %c0_i32_0 : i32, i32
  }
  func.func @transform_7(%arg0: i32) -> (i32, i32) {
    %c0_i32 = arith.constant 0 : i32
    %c0_i32_0 = arith.constant 0 : i32
    %c0_i32_1 = arith.constant 0 : i32
    return %c0_i32, %c0_i32_0 : i32, i32
  }
  func.func @transform_8(%arg0: i32) -> (i32, i32) {
    %c0_i32 = arith.constant 0 : i32
    %c0_i32_0 = arith.constant 0 : i32
    %c0_i32_1 = arith.constant 0 : i32
    return %c0_i32, %c0_i32_0 : i32, i32
  }
  func.func @transform_9(%arg0: i32) -> (i32, i32) {
    %c0_i32 = arith.constant 0 : i32
    %c0_i32_0 = arith.constant 0 : i32
    return %arg0, %c0_i32 : i32, i32
  }
}

</mosaic_0001>

<llo_original>
// kernel: projection_head_forward.1
$region0: #{projection_head_forward.1}
  #allocation0 [shape = 'u32[]', space=smem, size = 0x4, offset = 0x4, fixed_abs, tag = 'smem constant byte address 0x4 - core index']
  #allocation1 [shape = 'u32[72,128]{1,0:T(1,128)}', space=vmem, size = 0x9000, scoped, tag = 'internal scratch']
  %s0 = inlined_call_operand.vmem [shape: f32[8,128], index: 0, kind: input, shape index: {}]
  %s1 = inlined_call_operand.vmem [shape: f32[1,128], index: 1, kind: input, shape index: {}]
  %s2 = inlined_call_operand.vmem [shape: f32[1,128], index: 2, kind: input, shape index: {}]
  %s3 = inlined_call_operand.vmem [shape: bf16[128,128], index: 3, kind: input, shape index: {}]
  %s4 = inlined_call_operand.vmem [shape: f32[1,128], index: 4, kind: input, shape index: {}]
  %s5 = inlined_call_operand.vmem [shape: f32[1,128], index: 5, kind: input, shape index: {}]
  %s6 = inlined_call_operand.vmem [shape: f32[1,128], index: 6, kind: input, shape index: {}]
  %s7 = inlined_call_operand.vmem [shape: bf16[128,128], index: 7, kind: input, shape index: {}]
  %s8 = inlined_call_operand.vmem [shape: f32[1,128], index: 8, kind: input, shape index: {}]
  %s9 = inlined_call_operand.hbm [shape: f32[8,128], index: 9, kind: output, shape index: {}]
  %s10 = sld [smem:[#allocation0]]
  $region46: #{projection_head_forward.1} parent=0
    _
  %s12 = ssub.s32 1, %s10
  %s13 = scalar_select 0, %s12, %s10
  $region1: #{projection_head_forward.1} parent=0
    #allocation2 [shape = 'u8[4096]{0}', space=vmem, size = 0x1000, scoped, tag = 'output window, operand 0, single buffered']
    #allocation3 [shape = 's32[1]{0}', space=sflag, size = 0x4, scoped, tag = 'scoped memory for projection_head_forward.1']
    %14 = vsyncpa [#allocation3], 0
    // Predicated region
    $region2: #{projection_head_forward.1} parent=1 // pred_check
      _
    $region3: #{projection_head_forward.1} parent=1 // pred_check_branch
      %16 = sbr.rel (0) target = $region5
    $region4: #{projection_head_forward.1} parent=1 // pred_region
      _
    $region5: #{projection_head_forward.1} parent=1 // pred_fallthru
      _
    // Predicated region
    $region6: #{projection_head_forward.1} parent=1 // pred_check
      _
    $region7: #{projection_head_forward.1} parent=1 // pred_check_branch
      %18 = sbr.rel (0) target = $region9
    $region8: #{projection_head_forward.1} parent=1 // pred_region
      _
    $region9: #{projection_head_forward.1} parent=1 // pred_fallthru
      _
    // Predicated region
    $region10: #{projection_head_forward.1} parent=1 // pred_check
      _
    $region11: #{projection_head_forward.1} parent=1 // pred_check_branch
      %20 = sbr.rel (0) target = $region13
    $region12: #{projection_head_forward.1} parent=1 // pred_region
      _
    $region13: #{projection_head_forward.1} parent=1 // pred_fallthru
      _
    // Predicated region
    $region14: #{projection_head_forward.1} parent=1 // pred_check
      _
    $region15: #{projection_head_forward.1} parent=1 // pred_check_branch
      %22 = sbr.rel (0) target = $region17
    $region16: #{projection_head_forward.1} parent=1 // pred_region
      _
    $region17: #{projection_head_forward.1} parent=1 // pred_fallthru
      _
    // Predicated region
    $region18: #{projection_head_forward.1} parent=1 // pred_check
      _
    $region19: #{projection_head_forward.1} parent=1 // pred_check_branch
      %24 = sbr.rel (0) target = $region21
    $region20: #{projection_head_forward.1} parent=1 // pred_region
      _
    $region21: #{projection_head_forward.1} parent=1 // pred_fallthru
      _
    // Predicated region
    $region22: #{projection_head_forward.1} parent=1 // pred_check
      _
    $region23: #{projection_head_forward.1} parent=1 // pred_check_branch
      %26 = sbr.rel (0) target = $region25
    $region24: #{projection_head_forward.1} parent=1 // pred_region
      _
    $region25: #{projection_head_forward.1} parent=1 // pred_fallthru
      _
    // Predicated region
    $region26: #{projection_head_forward.1} parent=1 // pred_check
      _
    $region27: #{projection_head_forward.1} parent=1 // pred_check_branch
      %28 = sbr.rel (0) target = $region29
    $region28: #{projection_head_forward.1} parent=1 // pred_region
      _
    $region29: #{projection_head_forward.1} parent=1 // pred_fallthru
      _
    // Predicated region
    $region30: #{projection_head_forward.1} parent=1 // pred_check
      _
    $region31: #{projection_head_forward.1} parent=1 // pred_check_branch
      %30 = sbr.rel (0) target = $region33
    $region32: #{projection_head_forward.1} parent=1 // pred_region
      _
    $region33: #{projection_head_forward.1} parent=1 // pred_fallthru
      _
    // Predicated region
    $region34: #{projection_head_forward.1} parent=1 // pred_check
      _
    $region35: #{projection_head_forward.1} parent=1 // pred_check_branch
      %32 = sbr.rel (0) target = $region37
    $region36: #{projection_head_forward.1} parent=1 // pred_region
      _
    $region37: #{projection_head_forward.1} parent=1 // pred_fallthru
      _
    %v33 = vlaneseq
    %v34 = vand.u32 %v33, 127
    %vm35 = vcmp.lt.s32.totalorder %v34, 32
    %vm36 = vcmp.lt.s32.totalorder %v34, 64
    %v37 = vld [vmem:[%s0] sm:$0xff]
    %38 = vadd.xlane.f32.xlu0 %v37
    %v39 = vpop.xlane.xlu0 %38
    %v40 = vmul.f32 %v39, 0.03125
    %v41 = vsub.f32 %v37, %v40
    %v42 = vsel %vm35, 1, 0
    %vm43 = vcmp.eq.s32.totalorder %v42, 1
    %v44 = vsel %vm43, %v41, 0.0
    %v45 = vmul.f32 %v44, %v44
    %46 = vadd.xlane.f32.xlu0 %v45
    %v47 = vpop.xlane.xlu0 %46
    %v48 = vmul.f32 %v47, 0.03125
    %v49 = vadd.f32 %v48, 1e-05
    %v50 = vrsqrt.pop %v49
    %v51 = vmul.f32 %v50, %v49
    %v52 = vmul.f32 %v51, %v50
    %v53 = vmul.f32 0.5, %v52
    %v54 = vsub.f32 1.5, %v53
    %v55 = vmul.f32 %v50, %v54
    %vm56 = vweird.f32 %v49
    %vm57 = vweird.f32 %v50
    %vm58 = vmor %vm56, %vm57
    %v59 = vsel %vm58, %v50, %v55
    %v60 = vmul.f32 %v44, %v59
    %v61 = vld [vmem:[%s1] sm:$0x1]
    %v63 = vperm.slane %v61, 0
    %v65 = vmul.f32 %v60, %v63
    %v66 = vld [vmem:[%s2] sm:$0x1]
    %v68 = vperm.slane %v66, 0
    %v70 = vadd.f32 %v65, %v68
    %v71 = vmax.f32 %v70, 0.0
    %v72 = vpack.c.bf16 %v71, %v71
    %v73 = vld [vmem:[%s3] sm:$0xf]
    %v74 = vld [vmem:[%s3 + $0x4] sm:$0xf]
    %v75 = vld [vmem:[%s3 + $0x8] sm:$0xf]
    %v76 = vld [vmem:[%s3 + $0xc] sm:$0xf]
    %v77 = vld [vmem:[%s3 + $0x10] sm:$0xf]
    %v78 = vld [vmem:[%s3 + $0x14] sm:$0xf]
    %v79 = vld [vmem:[%s3 + $0x18] sm:$0xf]
    %v80 = vld [vmem:[%s3 + $0x1c] sm:$0xf]
    %v81 = vld [vmem:[%s3 + $0x20] sm:$0xf]
    %v82 = vld [vmem:[%s3 + $0x24] sm:$0xf]
    %v83 = vld [vmem:[%s3 + $0x28] sm:$0xf]
    %v84 = vld [vmem:[%s3 + $0x2c] sm:$0xf]
    %v85 = vld [vmem:[%s3 + $0x30] sm:$0xf]
    %v86 = vld [vmem:[%s3 + $0x34] sm:$0xf]
    %v87 = vld [vmem:[%s3 + $0x38] sm:$0xf]
    %v88 = vld [vmem:[%s3 + $0x3c] sm:$0xf]
    %v89 = vld [vmem:[%s4] sm:$0x1]
    %v91 = vperm.slane %v89, 0
    %v109 = vunpack.c.l.b16 %v73
    %v110 = vunpack.c.l.b16 %v74
    %v111 = vunpack.c.l.b16 %v75
    %v112 = vunpack.c.l.b16 %v76
    %v113 = vunpack.c.l.b16 %v77
    %v114 = vunpack.c.l.b16 %v78
    %v115 = vunpack.c.l.b16 %v79
    %v116 = vunpack.c.l.b16 %v80
    %v117 = vunpack.c.l.b16 %v81
    %v118 = vunpack.c.l.b16 %v82
    %v119 = vunpack.c.l.b16 %v83
    %v120 = vunpack.c.l.b16 %v84
    %v121 = vunpack.c.l.b16 %v85
    %v122 = vunpack.c.l.b16 %v86
    %v123 = vunpack.c.l.b16 %v87
    %v124 = vunpack.c.l.b16 %v88
    %v125 = vpack.c.b16 %v110, %v109
    %v126 = vpack.c.b16 %v112, %v111
    %v127 = vpack.c.b16 %v114, %v113
    %v128 = vpack.c.b16 %v116, %v115
    %v129 = vpack.c.b16 %v118, %v117
    %v130 = vpack.c.b16 %v120, %v119
    %v131 = vpack.c.b16 %v122, %v121
    %v132 = vpack.c.b16 %v124, %v123
    %141 = vmatpush.bf16.msra.mxu0 %v132
    %142 = vmatpush.bf16.msra.mxu0 %v131
    %143 = vmatpush.bf16.msra.mxu0 %v130
    %144 = vmatpush.bf16.msra.mxu0 %v129
    %145 = vmatpush.bf16.msra.mxu0 %v128
    %146 = vmatpush.bf16.msra.mxu0 %v127
    %147 = vmatpush.bf16.msra.mxu0 %v126
    %148 = vmatpush.bf16.msra.mxu0 %v125
    %149 = vmatmul.bf16.gmra.mxu0 %v72
    %v150 = vpop.f32.mrf.mxu0
    %v151 = vadd.f32 %v91, %v150
    %v152 = vpop.f32.mrf.mxu0
    %153 = vdwg.mxu0
    %154 = vadd.xlane.f32.xlu0 %v151
    %v155 = vpop.xlane.xlu0 %154
    %v156 = vmul.f32 %v155, 0.015625
    %v157 = vsub.f32 %v151, %v156
    %v158 = vsel %vm36, 1, 0
    %vm159 = vcmp.eq.s32.totalorder %v158, 1
    %v160 = vsel %vm159, %v157, 0.0
    %v161 = vmul.f32 %v160, %v160
    %162 = vadd.xlane.f32.xlu0 %v161
    %v163 = vpop.xlane.xlu0 %162
    %v164 = vmul.f32 %v163, 0.015625
    %v165 = vadd.f32 %v164, 1e-05
    %v166 = vrsqrt.pop %v165
    %v167 = vmul.f32 %v166, %v165
    %v168 = vmul.f32 %v167, %v166
    %v169 = vmul.f32 0.5, %v168
    %v170 = vsub.f32 1.5, %v169
    %v171 = vmul.f32 %v166, %v170
    %vm172 = vweird.f32 %v165
    %vm173 = vweird.f32 %v166
    %vm174 = vmor %vm172, %vm173
    %v175 = vsel %vm174, %v166, %v171
    %v176 = vmul.f32 %v160, %v175
    %v177 = vld [vmem:[%s5] sm:$0x1]
    %v179 = vperm.slane %v177, 0
    %v181 = vmul.f32 %v176, %v179
    %v182 = vld [vmem:[%s6] sm:$0x1]
    %v184 = vperm.slane %v182, 0
    %v186 = vadd.f32 %v181, %v184
    %v187 = vmax.f32 %v186, 0.0
    %v188 = vpack.c.bf16 %v187, %v187
    %v189 = vld [vmem:[%s7] sm:$0xf]
    %v190 = vld [vmem:[%s7 + $0x4] sm:$0xf]
    %v191 = vld [vmem:[%s7 + $0x8] sm:$0xf]
    %v192 = vld [vmem:[%s7 + $0xc] sm:$0xf]
    %v193 = vld [vmem:[%s7 + $0x10] sm:$0xf]
    %v194 = vld [vmem:[%s7 + $0x14] sm:$0xf]
    %v195 = vld [vmem:[%s7 + $0x18] sm:$0xf]
    %v196 = vld [vmem:[%s7 + $0x1c] sm:$0xf]
    %v197 = vld [vmem:[%s7 + $0x20] sm:$0xf]
    %v198 = vld [vmem:[%s7 + $0x24] sm:$0xf]
    %v199 = vld [vmem:[%s7 + $0x28] sm:$0xf]
    %v200 = vld [vmem:[%s7 + $0x2c] sm:$0xf]
    %v201 = vld [vmem:[%s7 + $0x30] sm:$0xf]
    %v202 = vld [vmem:[%s7 + $0x34] sm:$0xf]
    %v203 = vld [vmem:[%s7 + $0x38] sm:$0xf]
    %v204 = vld [vmem:[%s7 + $0x3c] sm:$0xf]
    %v205 = vld [vmem:[%s8] sm:$0x1]
    %v207 = vperm.slane %v205, 0
    %v225 = vunpack.c.l.b16 %v189
    %v226 = vunpack.c.l.b16 %v190
    %v227 = vunpack.c.l.b16 %v191
    %v228 = vunpack.c.l.b16 %v192
    %v229 = vunpack.c.l.b16 %v193
    %v230 = vunpack.c.l.b16 %v194
    %v231 = vunpack.c.l.b16 %v195
    %v232 = vunpack.c.l.b16 %v196
    %v233 = vunpack.c.l.b16 %v197
    %v234 = vunpack.c.l.b16 %v198
    %v235 = vunpack.c.l.b16 %v199
    %v236 = vunpack.c.l.b16 %v200
    %v237 = vunpack.c.l.b16 %v201
    %v238 = vunpack.c.l.b16 %v202
    %v239 = vunpack.c.l.b16 %v203
    %v240 = vunpack.c.l.b16 %v204
    %v241 = vpack.c.b16 %v226, %v225
    %v242 = vpack.c.b16 %v228, %v227
    %v243 = vpack.c.b16 %v230, %v229
    %v244 = vpack.c.b16 %v232, %v231
    %v245 = vpack.c.b16 %v234, %v233
    %v246 = vpack.c.b16 %v236, %v235
    %v247 = vpack.c.b16 %v238, %v237
    %v248 = vpack.c.b16 %v240, %v239
    %257 = vmatpush.bf16.msra.mxu0 %v248
    %258 = vmatpush.bf16.msra.mxu0 %v247
    %259 = vmatpush.bf16.msra.mxu0 %v246
    %260 = vmatpush.bf16.msra.mxu0 %v245
    %261 = vmatpush.bf16.msra.mxu0 %v244
    %262 = vmatpush.bf16.msra.mxu0 %v243
    %263 = vmatpush.bf16.msra.mxu0 %v242
    %264 = vmatpush.bf16.msra.mxu0 %v241
    %265 = vmatmul.bf16.gmra.mxu0 %v188
    %v266 = vpop.f32.mrf.mxu0
    %v267 = vadd.f32 %v207, %v266
    %v268 = vpop.f32.mrf.mxu0
    %269 = vdwg.mxu0
    %270 = vst [vmem:[#allocation2] sm:$0xff] %v267
    // Predicated region
    $region38: #{projection_head_forward.1} parent=1 // pred_check
      _
    $region39: #{projection_head_forward.1} parent=1 // pred_check_branch
      %272 = sbr.rel (0) target = $region41
    $region40: #{projection_head_forward.1} parent=1 // pred_region
      %274 = vsyncadd [#allocation3], 0
      %s276 = sshll.u32 [#allocation2], 4
      %s277 = int_to_ptr.vmem [resolvable:$true] %s276
      %s278 = sshll.u32 %s9, 4
      %s279 = int_to_ptr.hbm [resolvable:$true] %s278
      %281 = dma.vmem_to_hbm [thread:$0]  %s277, 128, %s279, [#allocation3]
    $region41: #{projection_head_forward.1} parent=1 // pred_fallthru
      _
    // Predicated region
    $region42: #{projection_head_forward.1} parent=1 // pred_check
      _
    $region43: #{projection_head_forward.1} parent=1 // pred_check_branch
      %283 = sbr.rel (0) target = $region45
    $region44: #{projection_head_forward.1} parent=1 // pred_region
      %285 = dma.done [#allocation3], 128
    $region45: #{projection_head_forward.1} parent=1 // pred_fallthru
      _
    %286 = vsyncpa [#allocation3], 1

</llo_original>
